<compile_context>
chip_gen: v7x
topology: tpu7x:2x2x1
jax: 0.10.0
libtpu: 0.0.40
codegen_flags: <defaults>
</compile_context>

<pallas_src>
import jax
import jax.numpy as jnp
from jax import lax
from jax.experimental import pallas as pl
from jax.experimental.pallas import tpu as pltpu

MXU_DTYPE = jnp.bfloat16      # bf16-native MXU on v5e/v6e/v7x, f32 accumulation
_MASK_VAL = -1e30             # safe in f32 with max-subtraction
_NEG_SLOPE = 0.2              # PyG GATConv default negative_slope


# --------------------------- chip-aware sizing --------------------------------
def _vmem_capacity_bytes():
  try:
    return int(pltpu.get_tpu_info().vmem_capacity_bytes)
  except Exception:
    return 64 * 1024 * 1024   # conservative (v7x) fallback


def _pick_tiles(n):
  """Pick the dst-tile size and vmem limit from the chip's VMEM capacity."""
  cap = _vmem_capacity_bytes()
  # 96 MiB on 128 MiB chips (v5e/v6e); ~48 MiB on 64 MiB v7x.
  vmem_limit = min(100 * 1024 * 1024, int(cap * 0.75))
  # live per dst-row in the attention kernel: e/p f32 [_, N] (~2 copies)
  # + the double-buffered int8 adj row + small epsilon for narrow operands.
  per_row = 8 * n + 2 * n + 64
  t = (vmem_limit // 2) // per_row
  t = max(8, min(512, (t // 8) * 8))
  tile_m = n if n <= t else t
  return tile_m, vmem_limit


# ----------------------------- projection kernel ------------------------------
def _proj_kernel(x_ref, w_ref, asmat_ref, admat_ref, h_ref, asrc_ref, adst_ref):
  x = x_ref[...].astype(MXU_DTYPE)                    # [TILE_M, Cin]
  w = w_ref[...].astype(MXU_DTYPE)                    # [Cin, H*f]
  h = jnp.dot(x, w, preferred_element_type=jnp.float32)   # [TILE_M, H*f] f32
  # f32 per-head logits (block-diagonal att vectors): stays exact even though
  # H is stored in bf16 below.
  asrc_ref[...] = jnp.dot(h, asmat_ref[...], preferred_element_type=jnp.float32)
  adst_ref[...] = jnp.dot(h, admat_ref[...], preferred_element_type=jnp.float32)
  h_ref[...] = h.astype(MXU_DTYPE)                    # bf16 H (MXU operand only)


def _project_fused(x, w, asmat, admat, *, tile_m, vmem_limit):
  """x:[N,Cin] f32, w:[Cin,H*f] f32, a*mat:[H*f,H] f32 ->
     (H bf16 [N,H*f], alpha_src f32 [N,H], alpha_dst f32 [N,H])."""
  n, cin = x.shape
  hf = w.shape[1]
  heads = asmat.shape[1]
  grid_m = pl.cdiv(n, tile_m)
  return pl.pallas_call(
      _proj_kernel,
      out_shape=(
          jax.ShapeDtypeStruct((n, hf), MXU_DTYPE),
          jax.ShapeDtypeStruct((n, heads), jnp.float32),
          jax.ShapeDtypeStruct((n, heads), jnp.float32),
      ),
      grid=(grid_m,),
      in_specs=[
          pl.BlockSpec((tile_m, cin), lambda i: (i, 0)),
          pl.BlockSpec((cin, hf), lambda i: (0, 0)),
          pl.BlockSpec((hf, heads), lambda i: (0, 0)),
          pl.BlockSpec((hf, heads), lambda i: (0, 0)),
      ],
      out_specs=(
          pl.BlockSpec((tile_m, hf), lambda i: (i, 0)),
          pl.BlockSpec((tile_m, heads), lambda i: (i, 0)),
          pl.BlockSpec((tile_m, heads), lambda i: (i, 0)),
      ),
      compiler_params=pltpu.CompilerParams(
          dimension_semantics=("parallel",),
          vmem_limit_bytes=vmem_limit),
  )(x, w, asmat, admat)


# ------------------------------ attention kernel ------------------------------
def _make_attn_kernel(heads, f_out, concat, apply_elu):
  """One (dst-tile, head) step of GATConv attention + aggregation."""

  def kernel(adj_ref, hpad_ref, asrc_ref, adst_ref, bias_ref, out_ref):
    a_s = asrc_ref[0]                                  # [1, N]       f32
    a_d = adst_ref[0]                                  # [TILE_M, 1]  f32

    e = a_s + a_d                                      # [TILE_M, N] (broadcast add)
    e = jnp.where(e > 0, e, _NEG_SLOPE * e)            # LeakyReLU(0.2)
    mask = adj_ref[...] > 0                            # int8 compare, no f32 cast
    e = jnp.where(mask, e, jnp.float32(_MASK_VAL))

    m = jnp.max(e, axis=-1, keepdims=True)
    # NOTE: exp kept in f32 for portability (v5e EUP has no bf16 path); the
    # result is consumed as bf16 by the MXU either way.
    p = jnp.exp(e - m).astype(MXU_DTYPE)               # [TILE_M, N] bf16

    # Aggregation + softmax denominator in ONE matmul: hpad's last column is
    # all ones, so acc[:, f_out] = sum_j p[i, j] (same precision as numerator).
    acc = jnp.dot(p, hpad_ref[0], preferred_element_type=jnp.float32)  # [T, f+1]
    res = acc[:, :f_out] * pl.reciprocal(acc[:, f_out:f_out + 1], approx=True)

    if concat:
      # Each head owns its own output block; bias + fused ELU per block.
      res = res + bias_ref[0]
      if apply_elu:
        res = jnp.where(res > 0, res, jnp.exp(jnp.minimum(res, 0.0)) - 1.0)
      out_ref[0] = res
    else:
      # Mean over heads: heads is the innermost ('arbitrary') axis and the
      # output block is resident across it (accumulator pattern).
      hd = pl.program_id(1)

      @pl.when(hd == 0)
      def _():
        out_ref[...] = jnp.zeros_like(out_ref)

      out_ref[...] += res

      @pl.when(hd == pl.num_programs(1) - 1)
      def _():
        o = out_ref[...] * (1.0 / heads) + bias_ref[0]
        if apply_elu:
          o = jnp.where(o > 0, o, jnp.exp(jnp.minimum(o, 0.0)) - 1.0)
        out_ref[...] = o

  return kernel


def gat_conv_pallas(x, adj, w, att_src, att_dst, bias, *, heads, f_out,
                    concat, apply_elu):
  """One GATConv layer. adj is dense [N_dst, N_src] int8 with self loops."""
  n, cin = x.shape
  tile_m, vmem_limit = _pick_tiles(n)
  grid_m = pl.cdiv(n, tile_m)

  # Block-diagonal attention-vector matrices [H*f, H] so the projection kernel
  # can emit per-head f32 logits with a single skinny contraction each.
  eye = jnp.eye(heads, dtype=jnp.float32)
  asmat = (att_src[:, :, None] * eye[:, None, :]).reshape(heads * f_out, heads)
  admat = (att_dst[:, :, None] * eye[:, None, :]).reshape(heads * f_out, heads)

  h_all, asrc, adst = _project_fused(x, w, asmat, admat,
                                     tile_m=tile_m, vmem_limit=vmem_limit)

  # Cheap XLA layout glue (O(N*H*f), negligible vs. the N^2 attention work):
  # head-major bf16 features with a fused ones column for the denominator.
  h_hm = h_all.reshape(n, heads, f_out).transpose(1, 0, 2)        # [H, N, f] bf16
  hpad = jnp.concatenate([h_hm, jnp.ones((heads, n, 1), MXU_DTYPE)], axis=-1)
  asrc3 = asrc.T.reshape(heads, 1, n)                              # [H, 1, N] f32
  adst3 = adst.T.reshape(heads, n, 1)                              # [H, N, 1] f32
  bias3 = bias.reshape(heads if concat else 1, 1, f_out)

  kernel = _make_attn_kernel(heads, f_out, concat, apply_elu)

  adj_spec = pl.BlockSpec((tile_m, n), lambda i, hd: (i, 0))       # resident over heads
  hpad_spec = pl.BlockSpec((1, n, f_out + 1), lambda i, hd: (hd, 0, 0))
  asrc_spec = pl.BlockSpec((1, 1, n), lambda i, hd: (hd, 0, 0))
  adst_spec = pl.BlockSpec((1, tile_m, 1), lambda i, hd: (hd, i, 0))

  if concat:
    bias_spec = pl.BlockSpec((1, 1, f_out), lambda i, hd: (hd, 0, 0))
    out_shape = jax.ShapeDtypeStruct((heads, n, f_out), jnp.float32)
    out_spec = pl.BlockSpec((1, tile_m, f_out), lambda i, hd: (hd, i, 0))
  else:
    bias_spec = pl.BlockSpec((1, 1, f_out), lambda i, hd: (0, 0, 0))
    out_shape = jax.ShapeDtypeStruct((n, f_out), jnp.float32)
    out_spec = pl.BlockSpec((tile_m, f_out), lambda i, hd: (i, 0))

  cost = pl.CostEstimate(
      flops=int(2 * heads * n * n * (f_out + 1) + 5 * heads * n * n),
      transcendentals=int(heads * n * n),
      bytes_accessed=int(n * n                                   # int8 adj (one pass)
                         + grid_m * heads * n * (f_out + 1) * 2  # bf16 hpad re-DMA
                         + grid_m * heads * n * 4                # alpha_src re-DMA
                         + heads * n * 4                         # alpha_dst
                         + n * f_out * (heads if concat else 1) * 4))

  out = pl.pallas_call(
      kernel,
      out_shape=out_shape,
      grid=(grid_m, heads),
      in_specs=[adj_spec, hpad_spec, asrc_spec, adst_spec, bias_spec],
      out_specs=out_spec,
      compiler_params=pltpu.CompilerParams(
          # heads innermost + 'arbitrary' on BOTH paths: the adj tile stays
          # resident across heads and megacore sharding only splits dst tiles.
          dimension_semantics=("parallel", "arbitrary"),
          vmem_limit_bytes=vmem_limit),
      cost_estimate=cost,
  )(adj, hpad, asrc3, adst3, bias3)

  if concat:
    # [H, N, f] -> [N, H*f]: cheap XLA transpose outside the kernel.
    out = out.transpose(1, 0, 2).reshape(n, heads * f_out)
  return out


# ------------------------- plain-JAX reference --------------------------------
def _gat_conv_ref(x, adj, w, att_src, att_dst, bias, *, heads, f_out, concat,
                  apply_elu, negative_slope=_NEG_SLOPE):
  n = x.shape[0]
  h = (x @ w).reshape(n, heads, f_out)
  alpha_src = jnp.einsum("nhf,hf->nh", h, att_src)      # [N, H]
  alpha_dst = jnp.einsum("nhf,hf->nh", h, att_dst)      # [N, H]
  e = alpha_dst[:, None, :] + alpha_src[None, :, :]     # [N_dst, N_src, H]
  e = jnp.where(e > 0, e, negative_slope * e)
  e = jnp.where(adj[..., None] > 0, e, _MASK_VAL)
  e = e - jnp.max(e, axis=1, keepdims=True)
  p = jnp.exp(e)
  att = p / jnp.sum(p, axis=1, keepdims=True)
  out = jnp.einsum("ijh,jhf->ihf", att, h)              # [N, H, f_out]
  out = out.reshape(n, heads * f_out) if concat else out.mean(axis=1)
  out = out + bias
  if apply_elu:
    out = jnp.where(out > 0, out, jnp.exp(jnp.minimum(out, 0.0)) - 1.0)
  return out


# ------------------------------- model -----------------------------------------
def init_gat_params(key, in_channels, hidden_channels, out_channels, heads):
  ks = jax.random.split(key, 6)
  scale = 0.1
  return {
      "w1": scale * jax.random.normal(ks[0], (in_channels, heads * hidden_channels), jnp.float32),
      "as1": scale * jax.random.normal(ks[1], (heads, hidden_channels), jnp.float32),
      "ad1": scale * jax.random.normal(ks[2], (heads, hidden_channels), jnp.float32),
      "b1": jnp.zeros((heads * hidden_channels,), jnp.float32),
      "w2": scale * jax.random.normal(ks[3], (heads * hidden_channels, out_channels), jnp.float32),
      "as2": scale * jax.random.normal(ks[4], (1, out_channels), jnp.float32),
      "ad2": scale * jax.random.normal(ks[5], (1, out_channels), jnp.float32),
      "b2": jnp.zeros((out_channels,), jnp.float32),
  }


def _build_adj(edge_index, n):
  # int8 dense adjacency (kernels only need `> 0`): 4x less HBM/VMEM than f32.
  src, dst = edge_index[0], edge_index[1]
  adj = jnp.zeros((n, n), jnp.int8).at[dst, src].set(1)
  idx = jnp.arange(n)
  return adj.at[idx, idx].set(1)   # add_self_loops=True (PyG default)


def gat_forward(params, x, edge_index, *, hidden_channels, out_channels,
                heads, conv_fn=gat_conv_pallas):
  n = x.shape[0]
  adj = _build_adj(edge_index, n)
  h = conv_fn(x, adj, params["w1"], params["as1"], params["ad1"], params["b1"],
              heads=heads, f_out=hidden_channels, concat=True, apply_elu=True)
  # TODO(synk): F.dropout(p=0.3) is identity in eval mode (training=False);
  # training-mode dropout is not implemented here.
  out = conv_fn(h, adj, params["w2"], params["as2"], params["ad2"], params["b2"],
                heads=1, f_out=out_channels, concat=False, apply_elu=False)
  return out


if __name__ == "__main__":
  N, IN_C, HID_C, OUT_C, HEADS = 16, 8, 8, 4, 4
  N_EDGES = 40

  key = jax.random.PRNGKey(0)
  kx, ks, kd, kp = jax.random.split(key, 4)
  x = jax.random.normal(kx, (N, IN_C), jnp.float32)
  src = jax.random.randint(ks, (N_EDGES,), 0, N)
  dst = jax.random.randint(kd, (N_EDGES,), 0, N)
  edge_index = jnp.stack([src, dst])                 # [2, E], row0=src, row1=dst

  params = init_gat_params(kp, IN_C, HID_C, OUT_C, HEADS)

  out = gat_forward(params, x, edge_index, hidden_channels=HID_C,
                    out_channels=OUT_C, heads=HEADS)
  out = jax.block_until_ready(out)

  ref = gat_forward(params, x, edge_index, hidden_channels=HID_C,
                    out_channels=OUT_C, heads=HEADS, conv_fn=_gat_conv_ref)
  ref = jax.block_until_ready(ref)

  assert out.shape == (N, OUT_C), out.shape
  # bf16 MXU operands + approx reciprocal => relax tolerance vs. pure-f32 ref.
  max_err = float(jnp.max(jnp.abs(out - ref)))
  assert jnp.allclose(out, ref, atol=2e-2, rtol=2e-2), max_err
  print("KERNEL_OK")
</pallas_src>

<mosaic_0001>
module attributes {stable_mosaic.version = 11 : i64} {
  func.func @_proj_kernel(%arg0: i32, %arg1: memref<16x8xf32, #tpu.memory_space<vmem>>, %arg2: memref<8x32xf32, #tpu.memory_space<vmem>>, %arg3: memref<32x4xf32, #tpu.memory_space<vmem>>, %arg4: memref<32x4xf32, #tpu.memory_space<vmem>>, %arg5: memref<16x32xbf16, #tpu.memory_space<vmem>>, %arg6: memref<16x4xf32, #tpu.memory_space<vmem>>, %arg7: memref<16x4xf32, #tpu.memory_space<vmem>>) attributes {dimension_semantics = [#tpu.dimension_semantics<parallel>], iteration_bounds = array<i64: 1>, scalar_prefetch = 0 : i64, scratch_operands = 0 : i64, tpu.core_type = #tpu.core_type<tc>, window_params = [{transform_indices = @transform_0, window_bounds = array<i64: 16, 8>}, {pipeline_mode = #tpu.pipeline_mode<synchronous>, transform_indices = @transform_1, window_bounds = array<i64: 8, 32>}, {pipeline_mode = #tpu.pipeline_mode<synchronous>, transform_indices = @transform_2, window_bounds = array<i64: 32, 4>}, {pipeline_mode = #tpu.pipeline_mode<synchronous>, transform_indices = @transform_3, window_bounds = array<i64: 32, 4>}, {transform_indices = @transform_4, window_bounds = array<i64: 16, 32>}, {transform_indices = @transform_5, window_bounds = array<i64: 16, 4>}, {transform_indices = @transform_6, window_bounds = array<i64: 16, 4>}]} {
    %c0 = arith.constant 0 : index
    %c0_0 = arith.constant 0 : index
    %0 = vector.load %arg1[%c0, %c0_0] : memref<16x8xf32, #tpu.memory_space<vmem>>, vector<16x8xf32>
    %1 = arith.truncf %0 : vector<16x8xf32> to vector<16x8xbf16>
    %c0_1 = arith.constant 0 : index
    %c0_2 = arith.constant 0 : index
    %2 = vector.load %arg2[%c0_1, %c0_2] : memref<8x32xf32, #tpu.memory_space<vmem>>, vector<8x32xf32>
    %3 = arith.truncf %2 : vector<8x32xf32> to vector<8x32xbf16>
    %cst = arith.constant dense<0.000000e+00> : vector<16x32xf32>
    %4 = tpu.matmul %1, %3, %cst {dimension_numbers = #tpu.dot_dimension_numbers<[1], [0], [0], [1], [0, 0, 1, 1], [], []>} : vector<16x8xbf16>, vector<8x32xbf16>, vector<16x32xf32> -> vector<16x32xf32>
    %c0_3 = arith.constant 0 : index
    %c0_4 = arith.constant 0 : index
    %5 = vector.load %arg3[%c0_3, %c0_4] : memref<32x4xf32, #tpu.memory_space<vmem>>, vector<32x4xf32>
    %cst_5 = arith.constant dense<0.000000e+00> : vector<16x4xf32>
    %6 = tpu.matmul %4, %5, %cst_5 {dimension_numbers = #tpu.dot_dimension_numbers<[1], [0], [0], [1], [0, 0, 1, 1], [], []>} : vector<16x32xf32>, vector<32x4xf32>, vector<16x4xf32> -> vector<16x4xf32>
    %c0_6 = arith.constant 0 : index
    %c0_7 = arith.constant 0 : index
    %7 = vector.load %arg6[%c0_6, %c0_7] : memref<16x4xf32, #tpu.memory_space<vmem>>, vector<16x4xf32>
    tpu.vector_store %arg6[%c0_6, %c0_7], %6 {strides = array<i32>} : memref<16x4xf32, #tpu.memory_space<vmem>>, vector<16x4xf32>,
    %c0_8 = arith.constant 0 : index
    %c0_9 = arith.constant 0 : index
    %8 = vector.load %arg4[%c0_8, %c0_9] : memref<32x4xf32, #tpu.memory_space<vmem>>, vector<32x4xf32>
    %cst_10 = arith.constant dense<0.000000e+00> : vector<16x4xf32>
    %9 = tpu.matmul %4, %8, %cst_10 {dimension_numbers = #tpu.dot_dimension_numbers<[1], [0], [0], [1], [0, 0, 1, 1], [], []>} : vector<16x32xf32>, vector<32x4xf32>, vector<16x4xf32> -> vector<16x4xf32>
    %c0_11 = arith.constant 0 : index
    %c0_12 = arith.constant 0 : index
    %10 = vector.load %arg7[%c0_11, %c0_12] : memref<16x4xf32, #tpu.memory_space<vmem>>, vector<16x4xf32>
    tpu.vector_store %arg7[%c0_11, %c0_12], %9 {strides = array<i32>} : memref<16x4xf32, #tpu.memory_space<vmem>>, vector<16x4xf32>,
    %11 = arith.truncf %4 : vector<16x32xf32> to vector<16x32xbf16>
    %c0_13 = arith.constant 0 : index
    %c0_14 = arith.constant 0 : index
    %12 = vector.load %arg5[%c0_13, %c0_14] : memref<16x32xbf16, #tpu.memory_space<vmem>>, vector<16x32xbf16>
    tpu.vector_store %arg5[%c0_13, %c0_14], %11 {strides = array<i32>} : memref<16x32xbf16, #tpu.memory_space<vmem>>, vector<16x32xbf16>,
    return
  }
  func.func @transform_0(%arg0: i32) -> (i32, i32) {
    %c0_i32 = arith.constant 0 : i32
    %c0_i32_0 = arith.constant 0 : i32
    return %arg0, %c0_i32 : i32, i32
  }
  func.func @transform_1(%arg0: i32) -> (i32, i32) {
    %c0_i32 = arith.constant 0 : i32
    %c0_i32_0 = arith.constant 0 : i32
    %c0_i32_1 = arith.constant 0 : i32
    return %c0_i32, %c0_i32_0 : i32, i32
  }
  func.func @transform_2(%arg0: i32) -> (i32, i32) {
    %c0_i32 = arith.constant 0 : i32
    %c0_i32_0 = arith.constant 0 : i32
    %c0_i32_1 = arith.constant 0 : i32
    return %c0_i32, %c0_i32_0 : i32, i32
  }
  func.func @transform_3(%arg0: i32) -> (i32, i32) {
    %c0_i32 = arith.constant 0 : i32
    %c0_i32_0 = arith.constant 0 : i32
    %c0_i32_1 = arith.constant 0 : i32
    return %c0_i32, %c0_i32_0 : i32, i32
  }
  func.func @transform_4(%arg0: i32) -> (i32, i32) {
    %c0_i32 = arith.constant 0 : i32
    %c0_i32_0 = arith.constant 0 : i32
    return %arg0, %c0_i32 : i32, i32
  }
  func.func @transform_5(%arg0: i32) -> (i32, i32) {
    %c0_i32 = arith.constant 0 : i32
    %c0_i32_0 = arith.constant 0 : i32
    return %arg0, %c0_i32 : i32, i32
  }
  func.func @transform_6(%arg0: i32) -> (i32, i32) {
    %c0_i32 = arith.constant 0 : i32
    %c0_i32_0 = arith.constant 0 : i32
    return %arg0, %c0_i32 : i32, i32
  }
}

</mosaic_0001>

<llo_original>
// kernel: tpu_custom_call.1
$region0: #{tpu_custom_call.1}
  #allocation0 [shape = 'u32[]', space=smem, size = 0x4, offset = 0x4, fixed_abs, tag = 'smem constant byte address 0x4 - core index']
  #allocation1 [shape = 'u32[144,128]{1,0:T(1,128)}', space=vmem, size = 0x12000, scoped, tag = 'internal scratch']
  %s0 = inlined_call_operand.vmem [shape: f32[16,8], index: 0, kind: input, shape index: {}]
  %s1 = inlined_call_operand.vmem [shape: f32[8,32], index: 1, kind: input, shape index: {}]
  %s2 = inlined_call_operand.vmem [shape: f32[32,4], index: 2, kind: input, shape index: {}]
  %s3 = inlined_call_operand.vmem [shape: f32[32,4], index: 3, kind: input, shape index: {}]
  %s4 = inlined_call_operand.hbm [shape: bf16[16,32], index: 4, kind: output, shape index: {0}]
  %s5 = inlined_call_operand.vmem [shape: f32[16,4], index: 5, kind: output, shape index: {1}]
  %s6 = inlined_call_operand.vmem [shape: f32[16,4], index: 6, kind: output, shape index: {2}]
  %7 = xla_tuple %s4, %s5, %s6
  %s8 = sld [smem:[#allocation0]]
  $region42: #{tpu_custom_call.1} parent=0
    _
  %s10 = ssub.s32 1, %s8
  %s11 = scalar_select 0, %s10, %s8
  $region1: #{tpu_custom_call.1} parent=0
    #allocation2 [shape = 'u8[4096]{0}', space=vmem, size = 0x1000, scoped, tag = 'output window, operand 0, single buffered']
    #allocation3 [shape = 's32[1]{0}', space=sflag, size = 0x4, scoped, tag = 'scoped memory for tpu_custom_call.1']
    %12 = vsyncpa [#allocation3], 0
    // Predicated region
    $region2: #{tpu_custom_call.1} parent=1 // pred_check
      _
    $region3: #{tpu_custom_call.1} parent=1 // pred_check_branch
      %14 = sbr.rel (0) target = $region5
    $region4: #{tpu_custom_call.1} parent=1 // pred_region
      _
    $region5: #{tpu_custom_call.1} parent=1 // pred_fallthru
      _
    // Predicated region
    $region6: #{tpu_custom_call.1} parent=1 // pred_check
      _
    $region7: #{tpu_custom_call.1} parent=1 // pred_check_branch
      %16 = sbr.rel (0) target = $region9
    $region8: #{tpu_custom_call.1} parent=1 // pred_region
      _
    $region9: #{tpu_custom_call.1} parent=1 // pred_fallthru
      _
    // Predicated region
    $region10: #{tpu_custom_call.1} parent=1 // pred_check
      _
    $region11: #{tpu_custom_call.1} parent=1 // pred_check_branch
      %18 = sbr.rel (0) target = $region13
    $region12: #{tpu_custom_call.1} parent=1 // pred_region
      _
    $region13: #{tpu_custom_call.1} parent=1 // pred_fallthru
      _
    // Predicated region
    $region14: #{tpu_custom_call.1} parent=1 // pred_check
      _
    $region15: #{tpu_custom_call.1} parent=1 // pred_check_branch
      %20 = sbr.rel (0) target = $region17
    $region16: #{tpu_custom_call.1} parent=1 // pred_region
      _
    $region17: #{tpu_custom_call.1} parent=1 // pred_fallthru
      _
    %v22 = vld [vmem:[%s0] sm:$0xff]
    %v23 = vld [vmem:[%s0 + $0x8] sm:$0xff]
    %v24 = vpack.c.bf16 %v23, %v22
    %v25 = vld [vmem:[%s1] sm:$0xff]
    %v26 = vpack.c.bf16 %v25, %v25
    %vm27 = vcmask 64512
    %v29 = vsel %vm27, %v24, 0
    %vm31 = vcmask 1043456
    %v33 = vsel %vm31, %v26, 0
    %35 = vmatprep.subr.bf16.mxu0 0
    %36 = vmatpush1.bf16.msra.mxu0 %v33
    %37 = vmatprep.subr.bf16.mxu0 0
    %38 = vmatpush1.bf16.msra.mxu0 0
    %39 = vmatprep.subr.bf16.mxu0 0
    %40 = vmatpush1.bf16.msra.mxu0 0
    %41 = vmatprep.subr.bf16.mxu0 0
    %42 = vmatpush1.bf16.msra.mxu0 0
    %43 = vmatprep.subr.bf16.mxu0 0
    %44 = vmatpush1.bf16.msra.mxu0 0
    %45 = vmatprep.subr.bf16.mxu0 0
    %46 = vmatpush1.bf16.msra.mxu0 0
    %47 = vmatprep.subr.bf16.mxu0 0
    %48 = vmatpush1.bf16.msra.mxu0 0
    %49 = vmatprep.subr.bf16.mxu0 0
    %50 = vmatpush1.bf16.msra.mxu0 0
    %51 = vmatprep.subr.bf16.mxu0 0
    %52 = vmatpush1.bf16.msra.mxu0 0
    %53 = vmatprep.subr.bf16.mxu0 0
    %54 = vmatpush1.bf16.msra.mxu0 0
    %55 = vmatprep.subr.bf16.mxu0 0
    %56 = vmatpush1.bf16.msra.mxu0 0
    %57 = vmatprep.subr.bf16.mxu0 0
    %58 = vmatpush1.bf16.msra.mxu0 0
    %59 = vmatprep.subr.bf16.mxu0 0
    %60 = vmatpush1.bf16.msra.mxu0 0
    %61 = vmatprep.subr.bf16.mxu0 0
    %62 = vmatpush1.bf16.msra.mxu0 0
    %63 = vmatprep.subr.bf16.mxu0 0
    %64 = vmatpush1.bf16.msra.mxu0 0
    %65 = vmatprep.subr.bf16.mxu0 0
    %66 = vmatpush1.bf16.msra.mxu0 0
    %67 = vmatprep.mubr.bf16.mxu0 0
    %68 = vmatmul.mubr.bf16.gmra.mrb[0].mxu0 %v29
    %v69 = vpop.f32.mrb[0].mxu0
    %v70 = vadd.f32 0.0, %v69
    %v71 = vpop.f32.mrb[0].mxu0
    %v72 = vpop.f32.mrb[0].mxu0
    %v73 = vadd.f32 0.0, %v72
    %v74 = vpop.f32.mrb[0].mxu0
    %75 = vdwg.mxu0
    %v76 = vld [vmem:[%s2] sm:$0xff]
    %v77 = vld [vmem:[%s2 + $0x8] sm:$0xff]
    %v78 = vld [vmem:[%s2 + $0x10] sm:$0xff]
    %v79 = vld [vmem:[%s2 + $0x18] sm:$0xff]
    %vm80 = vcmask 261120
    %v82 = vsel %vm80, %v70, 0
    %v85 = vsel %vm80, %v73, 0
    %87 = vmatprep.subr.mxu0 0.0
    %88 = vmatpush1.msra.mxu0 %v76
    %89 = vmatprep.subr.mxu0 0.0
    %90 = vmatpush1.msra.mxu0 %v77
    %91 = vmatprep.subr.mxu0 0.0
    %92 = vmatpush1.msra.mxu0 %v78
    %93 = vmatprep.subr.mxu0 0.0
    %94 = vmatpush1.msra.mxu0 %v79
    %95 = vmatprep.subr.mxu0 0.0
    %96 = vmatpush1.msra.mxu0 0.0
    %97 = vmatprep.subr.mxu0 0.0
    %98 = vmatpush1.msra.mxu0 0.0
    %99 = vmatprep.subr.mxu0 0.0
    %100 = vmatpush1.msra.mxu0 0.0
    %101 = vmatprep.subr.mxu0 0.0
    %102 = vmatpush1.msra.mxu0 0.0
    %103 = vmatprep.subr.mxu0 0.0
    %104 = vmatpush1.msra.mxu0 0.0
    %105 = vmatprep.subr.mxu0 0.0
    %106 = vmatpush1.msra.mxu0 0.0
    %107 = vmatprep.subr.mxu0 0.0
    %108 = vmatpush1.msra.mxu0 0.0
    %109 = vmatprep.subr.mxu0 0.0
    %110 = vmatpush1.msra.mxu0 0.0
    %111 = vmatprep.subr.mxu0 0.0
    %112 = vmatpush1.msra.mxu0 0.0
    %113 = vmatprep.subr.mxu0 0.0
    %114 = vmatpush1.msra.mxu0 0.0
    %115 = vmatprep.subr.mxu0 0.0
    %116 = vmatpush1.msra.mxu0 0.0
    %117 = vmatprep.subr.mxu0 0.0
    %118 = vmatpush1.msra.mxu0 0.0
    %119 = vmatprep.subr.mxu0 0.0
    %120 = vmatpush1.msra.mxu0 0.0
    %121 = vmatprep.subr.mxu0 0.0
    %122 = vmatpush1.msra.mxu0 0.0
    %123 = vmatprep.subr.mxu0 0.0
    %124 = vmatpush1.msra.mxu0 0.0
    %125 = vmatprep.subr.mxu0 0.0
    %126 = vmatpush1.msra.mxu0 0.0
    %127 = vmatprep.subr.mxu0 0.0
    %128 = vmatpush1.msra.mxu0 0.0
    %129 = vmatprep.subr.mxu0 0.0
    %130 = vmatpush1.msra.mxu0 0.0
    %131 = vmatprep.subr.mxu0 0.0
    %132 = vmatpush1.msra.mxu0 0.0
    %133 = vmatprep.subr.mxu0 0.0
    %134 = vmatpush1.msra.mxu0 0.0
    %135 = vmatprep.subr.mxu0 0.0
    %136 = vmatpush1.msra.mxu0 0.0
    %137 = vmatprep.subr.mxu0 0.0
    %138 = vmatpush1.msra.mxu0 0.0
    %139 = vmatprep.subr.mxu0 0.0
    %140 = vmatpush1.msra.mxu0 0.0
    %141 = vmatprep.subr.mxu0 0.0
    %142 = vmatpush1.msra.mxu0 0.0
    %143 = vmatprep.subr.mxu0 0.0
    %144 = vmatpush1.msra.mxu0 0.0
    %145 = vmatprep.subr.mxu0 0.0
    %146 = vmatpush1.msra.mxu0 0.0
    %147 = vmatprep.subr.mxu0 0.0
    %148 = vmatpush1.msra.mxu0 0.0
    %149 = vmatprep.subr.mxu0 0.0
    %150 = vmatpush1.msra.mxu0 0.0
    %151 = vmatprep.mubr.f32.mxu0 0.0
    %152 = vmatmul.mubr.f32.gmra.mrb[0].mxu0 %v82
    %v153 = vpop.f32.mrb[0].mxu0
    %v154 = vadd.f32 0.0, %v153
    %v155 = vpop.f32.mrb[0].mxu0
    %156 = vmatprep.mubr.f32.mxu0 0.0
    %157 = vmatmul.mubr.f32.gmra.mrb[0].mxu0 %v85
    %v158 = vpop.f32.mrb[0].mxu0
    %v159 = vadd.f32 0.0, %v158
    %v160 = vpop.f32.mrb[0].mxu0
    %161 = vdwg.mxu0
    %vm162 = vcmask 31744
    %163 = vst.msk [vmem:[%s5] sm:$0xff] %vm162, %v154
    %164 = vst.msk [vmem:[%s5 + $0x8] sm:$0xff] %vm162, %v159
    %v165 = vld [vmem:[%s3] sm:$0xff]
    %v166 = vld [vmem:[%s3 + $0x8] sm:$0xff]
    %v167 = vld [vmem:[%s3 + $0x10] sm:$0xff]
    %v168 = vld [vmem:[%s3 + $0x18] sm:$0xff]
    %169 = vmatprep.subr.mxu0 0.0
    %170 = vmatpush1.msra.mxu0 %v165
    %171 = vmatprep.subr.mxu0 0.0
    %172 = vmatpush1.msra.mxu0 %v166
    %173 = vmatprep.subr.mxu0 0.0
    %174 = vmatpush1.msra.mxu0 %v167
    %175 = vmatprep.subr.mxu0 0.0
    %176 = vmatpush1.msra.mxu0 %v168
    %177 = vmatprep.subr.mxu0 0.0
    %178 = vmatpush1.msra.mxu0 0.0
    %179 = vmatprep.subr.mxu0 0.0
    %180 = vmatpush1.msra.mxu0 0.0
    %181 = vmatprep.subr.mxu0 0.0
    %182 = vmatpush1.msra.mxu0 0.0
    %183 = vmatprep.subr.mxu0 0.0
    %184 = vmatpush1.msra.mxu0 0.0
    %185 = vmatprep.subr.mxu0 0.0
    %186 = vmatpush1.msra.mxu0 0.0
    %187 = vmatprep.subr.mxu0 0.0
    %188 = vmatpush1.msra.mxu0 0.0
    %189 = vmatprep.subr.mxu0 0.0
    %190 = vmatpush1.msra.mxu0 0.0
    %191 = vmatprep.subr.mxu0 0.0
    %192 = vmatpush1.msra.mxu0 0.0
    %193 = vmatprep.subr.mxu0 0.0
    %194 = vmatpush1.msra.mxu0 0.0
    %195 = vmatprep.subr.mxu0 0.0
    %196 = vmatpush1.msra.mxu0 0.0
    %197 = vmatprep.subr.mxu0 0.0
    %198 = vmatpush1.msra.mxu0 0.0
    %199 = vmatprep.subr.mxu0 0.0
    %200 = vmatpush1.msra.mxu0 0.0
    %201 = vmatprep.subr.mxu0 0.0
    %202 = vmatpush1.msra.mxu0 0.0
    %203 = vmatprep.subr.mxu0 0.0
    %204 = vmatpush1.msra.mxu0 0.0
    %205 = vmatprep.subr.mxu0 0.0
    %206 = vmatpush1.msra.mxu0 0.0
    %207 = vmatprep.subr.mxu0 0.0
    %208 = vmatpush1.msra.mxu0 0.0
    %209 = vmatprep.subr.mxu0 0.0
    %210 = vmatpush1.msra.mxu0 0.0
    %211 = vmatprep.subr.mxu0 0.0
    %212 = vmatpush1.msra.mxu0 0.0
    %213 = vmatprep.subr.mxu0 0.0
    %214 = vmatpush1.msra.mxu0 0.0
    %215 = vmatprep.subr.mxu0 0.0
    %216 = vmatpush1.msra.mxu0 0.0
    %217 = vmatprep.subr.mxu0 0.0
    %218 = vmatpush1.msra.mxu0 0.0
    %219 = vmatprep.subr.mxu0 0.0
    %220 = vmatpush1.msra.mxu0 0.0
    %221 = vmatprep.subr.mxu0 0.0
    %222 = vmatpush1.msra.mxu0 0.0
    %223 = vmatprep.subr.mxu0 0.0
    %224 = vmatpush1.msra.mxu0 0.0
    %225 = vmatprep.subr.mxu0 0.0
    %226 = vmatpush1.msra.mxu0 0.0
    %227 = vmatprep.subr.mxu0 0.0
    %228 = vmatpush1.msra.mxu0 0.0
    %229 = vmatprep.subr.mxu0 0.0
    %230 = vmatpush1.msra.mxu0 0.0
    %231 = vmatprep.subr.mxu0 0.0
    %232 = vmatpush1.msra.mxu0 0.0
    %233 = vmatprep.mubr.f32.mxu0 0.0
    %234 = vmatmul.mubr.f32.gmra.mrb[0].mxu0 %v82
    %v235 = vpop.f32.mrb[0].mxu0
    %v236 = vadd.f32 0.0, %v235
    %v237 = vpop.f32.mrb[0].mxu0
    %238 = vmatprep.mubr.f32.mxu0 0.0
    %239 = vmatmul.mubr.f32.gmra.mrb[0].mxu0 %v85
    %v240 = vpop.f32.mrb[0].mxu0
    %v241 = vadd.f32 0.0, %v240
    %v242 = vpop.f32.mrb[0].mxu0
    %243 = vdwg.mxu0
    %244 = vst.msk [vmem:[%s6] sm:$0xff] %vm162, %v236
    %245 = vst.msk [vmem:[%s6 + $0x8] sm:$0xff] %vm162, %v241
    %v246 = vpack.c.bf16 %v73, %v70
    %v248 = vunpack.c.l.b16 %v246
    %v249 = vunpack.c.h.b16 %v246
    %v250 = vpack.c.b16 %v248, %v248
    %v251 = vpack.c.b16 %v249, %v249
    %vm254 = vcmask 257024
    %255 = vst.msk [vmem:[#allocation2] sm:$0xf] %vm254, %v250
    %256 = vst.msk [vmem:[#allocation2 + $0x4] sm:$0xf] %vm254, %v251
    // Predicated region
    $region18: #{tpu_custom_call.1} parent=1 // pred_check
      _
    $region19: #{tpu_custom_call.1} parent=1 // pred_check_branch
      %258 = sbr.rel (0) target = $region21
    $region20: #{tpu_custom_call.1} parent=1 // pred_region
      %s260 = ssub.s32 128, 128
      %261 = vsyncadd [#allocation3], %s260
      %s262 = sshll.u32 [#allocation2], 4
      %s263 = int_to_ptr.vmem [resolvable:$true] %s262
      %268 = dma.vmem_to_hbm [thread:$0]  %s263, 128, %s4, [#allocation3], 64, 64, 4
    $region21: #{tpu_custom_call.1} parent=1 // pred_fallthru
      _
    // Predicated region
    $region22: #{tpu_custom_call.1} parent=1 // pred_check
      _
    $region23: #{tpu_custom_call.1} parent=1 // pred_check_branch
      %270 = sbr.rel (0) target = $region25
    $region24: #{tpu_custom_call.1} parent=1 // pred_region
      _
    $region25: #{tpu_custom_call.1} parent=1 // pred_fallthru
      _
    // Predicated region
    $region26: #{tpu_custom_call.1} parent=1 // pred_check
      _
    $region27: #{tpu_custom_call.1} parent=1 // pred_check_branch
      %272 = sbr.rel (0) target = $region29
    $region28: #{tpu_custom_call.1} parent=1 // pred_region
      _
    $region29: #{tpu_custom_call.1} parent=1 // pred_fallthru
      _
    // Predicated region
    $region30: #{tpu_custom_call.1} parent=1 // pred_check
      _
    $region31: #{tpu_custom_call.1} parent=1 // pred_check_branch
      %274 = sbr.rel (0) target = $region33
    $region32: #{tpu_custom_call.1} parent=1 // pred_region
      %275 = dma.done [#allocation3], 128
    $region33: #{tpu_custom_call.1} parent=1 // pred_fallthru
      _
    // Predicated region
    $region34: #{tpu_custom_call.1} parent=1 // pred_check
      _
    $region35: #{tpu_custom_call.1} parent=1 // pred_check_branch
      %277 = sbr.rel (0) target = $region37
    $region36: #{tpu_custom_call.1} parent=1 // pred_region
      _
    $region37: #{tpu_custom_call.1} parent=1 // pred_fallthru
      _
    // Predicated region
    $region38: #{tpu_custom_call.1} parent=1 // pred_check
      _
    $region39: #{tpu_custom_call.1} parent=1 // pred_check_branch
      %279 = sbr.rel (0) target = $region41
    $region40: #{tpu_custom_call.1} parent=1 // pred_region
      _
    $region41: #{tpu_custom_call.1} parent=1 // pred_fallthru
      _
    %280 = vsyncpa [#allocation3], 1

</llo_original>
